<compile_context>
chip_gen: v7x
topology: tpu7x:2x2x1
jax: 0.10.0
libtpu: 0.0.40
codegen_flags: <defaults>
</compile_context>

<pallas_src>
import jax
import jax.numpy as jnp
from jax.experimental import pallas as pl
from jax.experimental.pallas import tpu as pltpu


def _linreg_kernel(wb_ref, x_ref, o_ref):
    # wb_ref: SMEM scalar params [w, b] (f32); x_ref / o_ref: VMEM tiles.
    w = wb_ref[0]
    b = wb_ref[1]
    y = w * x_ref[...].astype(jnp.float32) + b
    o_ref[...] = y.astype(o_ref.dtype)


def _min_sublanes(dtype) -> int:
    """Minimum second-to-last block dim for the dtype's packed layout."""
    itemsize = jnp.dtype(dtype).itemsize
    if itemsize >= 4:
        return 8
    if itemsize == 2:
        return 16
    return 32


def linear_regression_forward(
    x: jax.Array,
    weights: jax.Array,
    bias: jax.Array,
    *,
    target_block_bytes: int = 4 * 1024 * 1024,   # ~4 MiB steady-state block
    min_grid_steps: int = 8,                     # pipelining + megacore sharding
    small_input_elems: int = 64 * 1024,          # below this, use plain JAX
    donate_x: bool = False,                      # alias x buffer to the output
) -> jax.Array:
    """Computes weights * x + bias (scalar broadcast), matching the PyTorch module."""
    orig_shape = x.shape
    dtype = x.dtype
    total = x.size
    itemsize = jnp.dtype(dtype).itemsize

    w32 = weights.reshape(-1)[0].astype(jnp.float32)
    b32 = bias.reshape(-1)[0].astype(jnp.float32)

    # ---- Small-input fast path: kernel-launch + plumbing would dominate. ----
    if total < max(small_input_elems, 8 * 128):
        return (w32 * x.astype(jnp.float32) + b32).astype(dtype)

    # ---- Choose lane width: largest multiple of 128 that divides total -> no pad. ----
    flat = x.reshape(-1)
    lane_width = None
    for cand in (1024, 512, 256, 128):
        if total % cand == 0:
            lane_width = cand
            break
    padded_total = total
    if lane_width is None:
        # Rare path: x.size not a multiple of 128. Pad by < 128 elements only.
        lane_width = 128
        padded_total = pl.cdiv(total, lane_width) * lane_width
        flat = jnp.pad(flat, (0, padded_total - total))
    rows = padded_total // lane_width
    x2d = flat.reshape(rows, lane_width)

    # ---- Adaptive tile_rows: ~target_block_bytes per block, >= min_grid_steps steps. ----
    floor_rows = _min_sublanes(dtype)
    tile_rows = max(target_block_bytes // (lane_width * itemsize), floor_rows)
    tile_rows = (tile_rows // floor_rows) * floor_rows
    while tile_rows > floor_rows and pl.cdiv(rows, tile_rows) < min_grid_steps:
        tile_rows = max(tile_rows // 2, floor_rows)

    grid = (pl.cdiv(rows, tile_rows),)
    block_bytes = tile_rows * lane_width * itemsize
    # Double-buffered input + output (~4 * block) plus margin; capped for v7x (64 MiB/TC).
    vmem_limit = min(32 * 1024 * 1024,
                     max(4 * block_bytes + 2 * 1024 * 1024, 8 * 1024 * 1024))

    wb = jnp.stack([w32, b32])  # SMEM scalar params [w, b]

    out2d = pl.pallas_call(
        _linreg_kernel,
        out_shape=jax.ShapeDtypeStruct((rows, lane_width), dtype),
        grid_spec=pl.GridSpec(
            grid=grid,
            in_specs=[
                pl.BlockSpec(memory_space=pltpu.SMEM),                    # [w, b]
                pl.BlockSpec((tile_rows, lane_width), lambda i: (i, 0)),  # x tile
            ],
            out_specs=pl.BlockSpec((tile_rows, lane_width), lambda i: (i, 0)),
        ),
        compiler_params=pltpu.CompilerParams(
            dimension_semantics=("parallel",),  # megacore split on v7x
            vmem_limit_bytes=vmem_limit,
        ),
        input_output_aliases=({1: 0} if (donate_x and padded_total == total) else {}),
    )(wb, x2d)

    if padded_total == total:
        # Common case: reshape is a free bitcast, no extra HBM pass.
        return out2d.reshape(orig_shape)
    return out2d.reshape(-1)[:total].reshape(orig_shape)


if __name__ == "__main__":
    key = jax.random.PRNGKey(0)
    kx1, kx2, kx3, kw, kb = jax.random.split(key, 5)

    # Deterministic parameter init (shapes from the module __init__: (1,) each).
    weights = jax.random.normal(kw, (1,), dtype=jnp.float32)
    bias = jax.random.normal(kb, (1,), dtype=jnp.float32)

    def ref_fn(x):
        return weights[0] * x + bias[0]

    # 1) Kernel path, lane-aligned (no padding, no trailing slice): 4*96*1024 = 393216 elems.
    x_main = jax.random.normal(kx1, (4, 96, 1024), dtype=jnp.float32)
    out_main = jax.block_until_ready(linear_regression_forward(x_main, weights, bias))
    assert out_main.shape == x_main.shape and out_main.dtype == x_main.dtype
    assert jnp.allclose(out_main, ref_fn(x_main), atol=1e-6), "mismatch (aligned kernel path)"

    # 2) Kernel path, non-128-multiple size: exercises minimal pad + ragged last tile.
    x_ragged = jax.random.normal(kx2, (3, 7, 5000), dtype=jnp.float32)
    out_ragged = jax.block_until_ready(linear_regression_forward(x_ragged, weights, bias))
    assert out_ragged.shape == x_ragged.shape
    assert jnp.allclose(out_ragged, ref_fn(x_ragged), atol=1e-6), "mismatch (ragged kernel path)"

    # 3) Tiny input: fast path (no pallas_call).
    x_small = jax.random.normal(kx3, (2, 16, 128), dtype=jnp.float32)
    out_small = jax.block_until_ready(linear_regression_forward(x_small, weights, bias))
    assert jnp.allclose(out_small, ref_fn(x_small), atol=1e-6), "mismatch (fast path)"

    print("KERNEL_OK")
</pallas_src>

<mosaic_0001>
module attributes {stable_mosaic.version = 11 : i64} {
  func.func @_linreg_kernel(%arg0: i32, %arg1: memref<2xf32, #tpu.memory_space<smem>>, %arg2: memref<32x1024xf32, #tpu.memory_space<vmem>>, %arg3: memref<32x1024xf32, #tpu.memory_space<vmem>>) attributes {dimension_semantics = [#tpu.dimension_semantics<parallel>], iteration_bounds = array<i64: 12>, scalar_prefetch = 0 : i64, scratch_operands = 0 : i64, tpu.core_type = #tpu.core_type<tc>, window_params = [{transform_indices = @transform_0, window_bounds = array<i64: 2>}, {transform_indices = @transform_1, window_bounds = array<i64: 32, 1024>}, {transform_indices = @transform_2, window_bounds = array<i64: 32, 1024>}]} {
    %c0 = arith.constant 0 : index
    %0 = memref.load %arg1[%c0] : memref<2xf32, #tpu.memory_space<smem>>
    %c1 = arith.constant 1 : index
    %1 = memref.load %arg1[%c1] : memref<2xf32, #tpu.memory_space<smem>>
    %c0_0 = arith.constant 0 : index
    %c0_1 = arith.constant 0 : index
    %2 = vector.load %arg2[%c0_0, %c0_1] : memref<32x1024xf32, #tpu.memory_space<vmem>>, vector<32x1024xf32>
    %3 = vector.broadcast %0 : f32 to vector<32x1024xf32>
    %4 = arith.mulf %3, %2 : vector<32x1024xf32>
    %5 = vector.broadcast %1 : f32 to vector<32x1024xf32>
    %6 = arith.addf %4, %5 : vector<32x1024xf32>
    %c0_2 = arith.constant 0 : index
    %c0_3 = arith.constant 0 : index
    %7 = vector.load %arg3[%c0_2, %c0_3] : memref<32x1024xf32, #tpu.memory_space<vmem>>, vector<32x1024xf32>
    tpu.vector_store %arg3[%c0_2, %c0_3], %6 {strides = array<i32>} : memref<32x1024xf32, #tpu.memory_space<vmem>>, vector<32x1024xf32>,
    return
  }
  func.func @transform_0(%arg0: i32) -> i32 {
    %c0_i32 = arith.constant 0 : i32
    %c0_i32_0 = arith.constant 0 : i32
    return %c0_i32 : i32
  }
  func.func @transform_1(%arg0: i32) -> (i32, i32) {
    %c0_i32 = arith.constant 0 : i32
    %c0_i32_0 = arith.constant 0 : i32
    return %arg0, %c0_i32 : i32, i32
  }
  func.func @transform_2(%arg0: i32) -> (i32, i32) {
    %c0_i32 = arith.constant 0 : i32
    %c0_i32_0 = arith.constant 0 : i32
    return %arg0, %c0_i32 : i32, i32
  }
}

</mosaic_0001>

<llo_original>
// kernel: tpu_custom_call.1
$region0: #{tpu_custom_call.1}
  #allocation0 [shape = 'u32[]', space=smem, size = 0x4, offset = 0x4, fixed_abs, tag = 'smem constant byte address 0x4 - core index']
  #allocation1 [shape = 'u32[144,128]{1,0:T(1,128)}', space=vmem, size = 0x12000, scoped, tag = 'internal scratch']
  %s0 = inlined_call_operand.hbm [shape: f32[2], index: 0, kind: input, shape index: {}]
  %s1 = inlined_call_operand.hbm [shape: f32[384,1024], index: 1, kind: input, shape index: {}]
  %s2 = inlined_call_operand.hbm [shape: f32[384,1024], index: 2, kind: output, shape index: {}]
  %s3 = sld [smem:[#allocation0]]
  $region49: #{tpu_custom_call.1} parent=0
    _
  %s5 = ssub.s32 1, %s3
  %s6 = scalar_select 0, %s5, %s3
  $region1: #{tpu_custom_call.1} parent=0
    #allocation2 [shape = 'u8[512]{0}', space=smem, size = 0x200, scoped, tag = 'input window, operand 0, single buffered']
    #allocation3 [shape = 's32[2]{0}', space=sflag, size = 0x8, scoped, tag = 'scoped memory for tpu_custom_call.1']
    #allocation4 [shape = 's32[2]{0}', space=sflag, size = 0x8, scoped, tag = 'scoped memory for tpu_custom_call.1']
    #allocation5 [shape = 's32[2]{0}', space=sflag, size = 0x8, scoped, tag = 'scoped memory for tpu_custom_call.1']
    #allocation6 [shape = 'u8[262144]{0}', space=vmem, size = 0x40000, scoped, tag = 'input window, operand 1']
    #allocation7 [shape = 'u8[262144]{0}', space=vmem, size = 0x40000, scoped, tag = 'output window, operand 0']
    %7 = vsyncpa [#allocation5], 0
    %8 = vsyncpa [#allocation3], 0
    %s9 = scalar_lea.sflag [#allocation3], 1
    %10 = vsyncpa %s9, 0
    %11 = vsyncpa [#allocation4], 0
    %s12 = scalar_lea.sflag [#allocation4], 1
    %13 = vsyncpa %s12, 0
    loop: start=0, step=1, limit=14
    $region2: #{tpu_custom_call.1} parent=1 // loop_pre_header
      _
    $region3: #{tpu_custom_call.1} parent=1 // loop_header
      %s15 = sphi 0, %s19
      %p16 = scmp.ge.s32.totalorder %s15, 14
      %s23 = sphi 0, %s23
      %s25 = sphi 0, %s23
      %s26 = sphi 0, %s25
      %s40 = sphi 0, %s26
      %s46 = sphi 0, %s48
      %s49 = sphi 0, %s46
      %s50 = sphi 0, %s49
      %s66 = sphi 0, %s50
      %s72 = sphi 0, %s74
      %s75 = sphi 0, %s72
      %s76 = sphi 0, %s75
      %s92 = sphi 0, %s76
    $region4: #{tpu_custom_call.1} parent=1 // loop_header_branch
      %18 = sbr.rel (%p16) target = $region8
    $region5: #{tpu_custom_call.1} parent=1 // loop_body
      %s20 = ssub.s32 %s15, 1
      %s21 = ssub.s32 %s15, 2
      %s22 = sadd.s32 %s15, 1
      %s24 = sadd.s32 %s23, 1
      %p27 = scmp.eq.s32.totalorder %s15, 11
      %p28 = scmp.ne.s32.totalorder %s23, %s25
      %p29 = scmp.eq.s32.totalorder %s15, 0
      %p30 = por %p28, %p29
      %p31 = scmp.ne.s32.totalorder %s23, %s25
      %p32 = scmp.eq.s32.totalorder %s20, 11
      %p33 = por %p31, %p32
      %p34 = scmp.ne.s32.totalorder %s25, %s26
      %p35 = scmp.eq.s32.totalorder %s20, 0
      %p36 = por %p34, %p35
      %p37 = scmp.ne.s32.totalorder %s25, %s26
      %p38 = scmp.eq.s32.totalorder %s21, 11
      %p39 = por %p37, %p38
      %p41 = scmp.ne.s32.totalorder %s26, %s40
      %p42 = scmp.eq.s32.totalorder %s21, 0
      %p43 = por %p41, %p42
      %s44 = ssub.s32 %s15, %s22
      %p45 = scmp.eq.s32.totalorder %s44, 0
      %s47 = sadd.s32 %s46, 1
      %s48 = scalar_select %p45, %s46, %s47
      %p51 = pneg %p45
      %p52 = scmp.eq.s32.totalorder %s15, 11
      %p53 = por %p51, %p52
      %p54 = scmp.ne.s32.totalorder %s46, %s49
      %p55 = scmp.eq.s32.totalorder %s15, 0
      %p56 = por %p54, %p55
      %p57 = scmp.ne.s32.totalorder %s46, %s49
      %p58 = scmp.eq.s32.totalorder %s20, 11
      %p59 = por %p57, %p58
      %p60 = scmp.ne.s32.totalorder %s49, %s50
      %p61 = scmp.eq.s32.totalorder %s20, 0
      %p62 = por %p60, %p61
      %p63 = scmp.ne.s32.totalorder %s49, %s50
      %p64 = scmp.eq.s32.totalorder %s21, 11
      %p65 = por %p63, %p64
      %p67 = scmp.ne.s32.totalorder %s50, %s66
      %p68 = scmp.eq.s32.totalorder %s21, 0
      %p69 = por %p67, %p68
      %s70 = ssub.s32 %s15, %s22
      %p71 = scmp.eq.s32.totalorder %s70, 0
      %s73 = sadd.s32 %s72, 1
      %s74 = scalar_select %p71, %s72, %s73
      %p77 = pneg %p71
      %p78 = scmp.eq.s32.totalorder %s15, 11
      %p79 = por %p77, %p78
      %p80 = scmp.ne.s32.totalorder %s72, %s75
      %p81 = scmp.eq.s32.totalorder %s15, 0
      %p82 = por %p80, %p81
      %p83 = scmp.ne.s32.totalorder %s72, %s75
      %p84 = scmp.eq.s32.totalorder %s20, 11
      %p85 = por %p83, %p84
      %p86 = scmp.ne.s32.totalorder %s75, %s76
      %p87 = scmp.eq.s32.totalorder %s20, 0
      %p88 = por %p86, %p87
      %p89 = scmp.ne.s32.totalorder %s75, %s76
      %p90 = scmp.eq.s32.totalorder %s21, 11
      %p91 = por %p89, %p90
      %p93 = scmp.ne.s32.totalorder %s76, %s92
      %p94 = scmp.eq.s32.totalorder %s21, 0
      %p95 = por %p93, %p94
      %p96 = scmp.le.s32.totalorder 1, %s15
      %p97 = scmp.lt.s32.totalorder %s15, 13
      %p98 = pnand %p96, %p97
      %p99 = pneg %p98
      // Predicated region
      $region9: #{tpu_custom_call.1} parent=5 // pred_check
        _
      $region10: #{tpu_custom_call.1} parent=5 // pred_check_branch
        %101 = sbr.rel (%p98) target = $region12
      $region11: #{tpu_custom_call.1} parent=5 // pred_region
        %s102 = ssub.s32 %s15, 1
        // Predicated region
        $region13: #{tpu_custom_call.1} parent=11 // pred_check
          %p103 = pneg %p36
        $region14: #{tpu_custom_call.1} parent=11 // pred_check_branch
          %105 = sbr.rel (%p103) target = $region16
        $region15: #{tpu_custom_call.1} parent=11 // pred_region
          %s107 = ssub.s32 16, 16
          %108 = vsyncadd [#allocation5], %s107
          %111 = dma.hbm_to_smem %s0, 16, [#allocation2], [#allocation5]
        $region16: #{tpu_custom_call.1} parent=11 // pred_fallthru
          _
      $region12: #{tpu_custom_call.1} parent=5 // pred_fallthru
        _
      %p112 = scmp.lt.s32.totalorder %s15, 12
      // Predicated region
      $region17: #{tpu_custom_call.1} parent=5 // pred_check
        %p113 = pneg %p112
      $region18: #{tpu_custom_call.1} parent=5 // pred_check_branch
        %115 = sbr.rel (%p113) target = $region20
      $region19: #{tpu_custom_call.1} parent=5 // pred_region
        // Predicated region
        $region21: #{tpu_custom_call.1} parent=19 // pred_check
          %p116 = pneg %p56
        $region22: #{tpu_custom_call.1} parent=19 // pred_check_branch
          %118 = sbr.rel (%p116) target = $region24
        $region23: #{tpu_custom_call.1} parent=19 // pred_region
          %s119 = sand.u32 %s46, 1
          %s120 = scalar_lea.sflag [#allocation3], %s119
          %s121 = sand.u32 %s46, 1
          %s122 = smul.addr %s121, 256
          %s123 = scalar_lea.vmem [#allocation6], %s122
          %s124 = smul.u32 4, %s15
          %s126 = ssub.s32 4096, 4096
          %127 = vsyncadd %s120, %s126
          %s128 = smul.addr %s124, 8
          %s129 = smul.addr %s128, 128
          %s130 = scalar_lea.hbm %s1, %s129
          %s131 = sshll.u32 %s123, 4
          %s132 = int_to_ptr.vmem [resolvable:$true] %s131
          %137 = dma.hbm_to_vmem [thread:$0]  %s130, 4096, %s132, %s120, 1024, 1024, 64
        $region24: #{tpu_custom_call.1} parent=19 // pred_fallthru
          _
      $region20: #{tpu_custom_call.1} parent=5 // pred_fallthru
        _
      %p138 = scmp.le.s32.totalorder 1, %s15
      %p139 = scmp.lt.s32.totalorder %s15, 13
      %p140 = pnand %p138, %p139
      %p141 = pneg %p140
      // Predicated region
      $region25: #{tpu_custom_call.1} parent=5 // pred_check
        _
      $region26: #{tpu_custom_call.1} parent=5 // pred_check_branch
        %143 = sbr.rel (%p140) target = $region28
      $region27: #{tpu_custom_call.1} parent=5 // pred_region
        %s144 = ssub.s32 %s15, 1
        // Predicated region
        $region29: #{tpu_custom_call.1} parent=27 // pred_check
          %p145 = pneg %p36
        $region30: #{tpu_custom_call.1} parent=27 // pred_check_branch
          %147 = sbr.rel (%p145) target = $region32
        $region31: #{tpu_custom_call.1} parent=27 // pred_region
          %148 = dma.done [#allocation5], 16
        $region32: #{tpu_custom_call.1} parent=27 // pred_fallthru
          _
        %s149 = sand.u32 %s49, 1
        %s150 = scalar_lea.sflag [#allocation3], %s149
        %s151 = sand.u32 %s49, 1
        %s152 = smul.addr %s151, 256
        %s153 = scalar_lea.vmem [#allocation6], %s152
        // Predicated region
        $region33: #{tpu_custom_call.1} parent=27 // pred_check
          %p154 = pneg %p62
        $region34: #{tpu_custom_call.1} parent=27 // pred_check_branch
          %156 = sbr.rel (%p154) target = $region36
        $region35: #{tpu_custom_call.1} parent=27 // pred_region
          %157 = dma.done %s150, 4096
        $region36: #{tpu_custom_call.1} parent=27 // pred_fallthru
          _
        %158 = sfence
        %p159 = pneg %p36
        %p160 = pneg %p33
        %s161 = sand.u32 %s49, 1
        %s162 = scalar_lea.sflag [#allocation3], %s161
        %s163 = sand.u32 %s49, 1
        %s164 = smul.addr %s163, 256
        %s165 = scalar_lea.vmem [#allocation6], %s164
        %p166 = pneg %p62
        %p167 = pneg %p59
        %p168 = pneg %p88
        %p169 = pneg %p85
        %s170 = sand.u32 %s75, 1
        %s171 = scalar_lea.sflag [#allocation4], %s170
        %s172 = sand.u32 %s75, 1
        %s173 = smul.addr %s172, 256
        %s174 = scalar_lea.vmem [#allocation7], %s173
        %s175 = smul.u32 4, %s20
        %s176 = smul.u32 4, %s20
        %s177 = sld [smem:[#allocation2]]
        %s178 = sld [smem:[#allocation2 + $0x1]]
        %v179 = vld [vmem:[%s153] sm:$0xff]
        %v180 = vld [vmem:[%s153 + $0x8] sm:$0xff]
        %v181 = vld [vmem:[%s153 + $0x10] sm:$0xff]
        %v182 = vld [vmem:[%s153 + $0x18] sm:$0xff]
        %v183 = vld [vmem:[%s153 + $0x20] sm:$0xff]
        %v184 = vld [vmem:[%s153 + $0x28] sm:$0xff]
        %v185 = vld [vmem:[%s153 + $0x30] sm:$0xff]
        %v186 = vld [vmem:[%s153 + $0x38] sm:$0xff]
        %v187 = vld [vmem:[%s153 + $0x40] sm:$0xff]
        %v188 = vld [vmem:[%s153 + $0x48] sm:$0xff]
        %v189 = vld [vmem:[%s153 + $0x50] sm:$0xff]
        %v190 = vld [vmem:[%s153 + $0x58] sm:$0xff]
        %v191 = vld [vmem:[%s153 + $0x60] sm:$0xff]
        %v192 = vld [vmem:[%s153 + $0x68] sm:$0xff]
        %v193 = vld [vmem:[%s153 + $0x70] sm:$0xff]
        %v194 = vld [vmem:[%s153 + $0x78] sm:$0xff]
        %v195 = vld [vmem:[%s153 + $0x80] sm:$0xff]
        %v196 = vld [vmem:[%s153 + $0x88] sm:$0xff]
        %v197 = vld [vmem:[%s153 + $0x90] sm:$0xff]
        %v198 = vld [vmem:[%s153 + $0x98] sm:$0xff]
        %v199 = vld [vmem:[%s153 + $0xa0] sm:$0xff]
        %v200 = vld [vmem:[%s153 + $0xa8] sm:$0xff]
        %v201 = vld [vmem:[%s153 + $0xb0] sm:$0xff]
        %v202 = vld [vmem:[%s153 + $0xb8] sm:$0xff]
        %v203 = vld [vmem:[%s153 + $0xc0] sm:$0xff]
        %v204 = vld [vmem:[%s153 + $0xc8] sm:$0xff]
        %v205 = vld [vmem:[%s153 + $0xd0] sm:$0xff]
        %v206 = vld [vmem:[%s153 + $0xd8] sm:$0xff]
        %v207 = vld [vmem:[%s153 + $0xe0] sm:$0xff]
        %v208 = vld [vmem:[%s153 + $0xe8] sm:$0xff]
        %v209 = vld [vmem:[%s153 + $0xf0] sm:$0xff]
        %v210 = vld [vmem:[%s153 + $0xf8] sm:$0xff]
        %v211 = vstv %s177
        %v212 = vmul.f32 %v211, %v179
        %v213 = vmul.f32 %v211, %v180
        %v214 = vmul.f32 %v211, %v181
        %v215 = vmul.f32 %v211, %v182
        %v216 = vmul.f32 %v211, %v183
        %v217 = vmul.f32 %v211, %v184
        %v218 = vmul.f32 %v211, %v185
        %v219 = vmul.f32 %v211, %v186
        %v220 = vmul.f32 %v211, %v187
        %v221 = vmul.f32 %v211, %v188
        %v222 = vmul.f32 %v211, %v189
        %v223 = vmul.f32 %v211, %v190
        %v224 = vmul.f32 %v211, %v191
        %v225 = vmul.f32 %v211, %v192
        %v226 = vmul.f32 %v211, %v193
        %v227 = vmul.f32 %v211, %v194
        %v228 = vmul.f32 %v211, %v195
        %v229 = vmul.f32 %v211, %v196
        %v230 = vmul.f32 %v211, %v197
        %v231 = vmul.f32 %v211, %v198
        %v232 = vmul.f32 %v211, %v199
        %v233 = vmul.f32 %v211, %v200
        %v234 = vmul.f32 %v211, %v201
        %v235 = vmul.f32 %v211, %v202
        %v236 = vmul.f32 %v211, %v203
        %v237 = vmul.f32 %v211, %v204
        %v238 = vmul.f32 %v211, %v205
        %v239 = vmul.f32 %v211, %v206
        %v240 = vmul.f32 %v211, %v207
        %v241 = vmul.f32 %v211, %v208
        %v242 = vmul.f32 %v211, %v209
        %v243 = vmul.f32 %v211, %v210
        %v244 = vstv %s178
        %v245 = vadd.f32 %v212, %v244
        %v246 = vadd.f32 %v213, %v244
        %v247 = vadd.f32 %v214, %v244
        %v248 = vadd.f32 %v215, %v244
        %v249 = vadd.f32 %v216, %v244
        %v250 = vadd.f32 %v217, %v244
        %v251 = vadd.f32 %v218, %v244
        %v252 = vadd.f32 %v219, %v244
        %v253 = vadd.f32 %v220, %v244
        %v254 = vadd.f32 %v221, %v244
        %v255 = vadd.f32 %v222, %v244
        %v256 = vadd.f32 %v223, %v244
        %v257 = vadd.f32 %v224, %v244
        %v258 = vadd.f32 %v225, %v244
        %v259 = vadd.f32 %v226, %v244
        %v260 = vadd.f32 %v227, %v244
        %v261 = vadd.f32 %v228, %v244
        %v262 = vadd.f32 %v229, %v244
        %v263 = vadd.f32 %v230, %v244
        %v264 = vadd.f32 %v231, %v244
        %v265 = vadd.f32 %v232, %v244
        %v266 = vadd.f32 %v233, %v244
        %v267 = vadd.f32 %v234, %v244
        %v268 = vadd.f32 %v235, %v244
        %v269 = vadd.f32 %v236, %v244
        %v270 = vadd.f32 %v237, %v244
        %v271 = vadd.f32 %v238, %v244
        %v272 = vadd.f32 %v239, %v244
        %v273 = vadd.f32 %v240, %v244
        %v274 = vadd.f32 %v241, %v244
        %v275 = vadd.f32 %v242, %v244
        %v276 = vadd.f32 %v243, %v244
        %277 = vst [vmem:[%s174] sm:$0xff] %v245
        %278 = vst [vmem:[%s174 + $0x8] sm:$0xff] %v246
        %279 = vst [vmem:[%s174 + $0x10] sm:$0xff] %v247
        %280 = vst [vmem:[%s174 + $0x18] sm:$0xff] %v248
        %281 = vst [vmem:[%s174 + $0x20] sm:$0xff] %v249
        %282 = vst [vmem:[%s174 + $0x28] sm:$0xff] %v250
        %283 = vst [vmem:[%s174 + $0x30] sm:$0xff] %v251
        %284 = vst [vmem:[%s174 + $0x38] sm:$0xff] %v252
        %285 = vst [vmem:[%s174 + $0x40] sm:$0xff] %v253
        %286 = vst [vmem:[%s174 + $0x48] sm:$0xff] %v254
        %287 = vst [vmem:[%s174 + $0x50] sm:$0xff] %v255
        %288 = vst [vmem:[%s174 + $0x58] sm:$0xff] %v256
        %289 = vst [vmem:[%s174 + $0x60] sm:$0xff] %v257
        %290 = vst [vmem:[%s174 + $0x68] sm:$0xff] %v258
        %291 = vst [vmem:[%s174 + $0x70] sm:$0xff] %v259
        %292 = vst [vmem:[%s174 + $0x78] sm:$0xff] %v260
        %293 = vst [vmem:[%s174 + $0x80] sm:$0xff] %v261
        %294 = vst [vmem:[%s174 + $0x88] sm:$0xff] %v262
        %295 = vst [vmem:[%s174 + $0x90] sm:$0xff] %v263
        %296 = vst [vmem:[%s174 + $0x98] sm:$0xff] %v264
        %297 = vst [vmem:[%s174 + $0xa0] sm:$0xff] %v265
        %298 = vst [vmem:[%s174 + $0xa8] sm:$0xff] %v266
        %299 = vst [vmem:[%s174 + $0xb0] sm:$0xff] %v267
        %300 = vst [vmem:[%s174 + $0xb8] sm:$0xff] %v268
        %301 = vst [vmem:[%s174 + $0xc0] sm:$0xff] %v269
        %302 = vst [vmem:[%s174 + $0xc8] sm:$0xff] %v270
        %303 = vst [vmem:[%s174 + $0xd0] sm:$0xff] %v271
        %304 = vst [vmem:[%s174 + $0xd8] sm:$0xff] %v272
        %305 = vst [vmem:[%s174 + $0xe0] sm:$0xff] %v273
        %306 = vst [vmem:[%s174 + $0xe8] sm:$0xff] %v274
        %307 = vst [vmem:[%s174 + $0xf0] sm:$0xff] %v275
        %308 = vst [vmem:[%s174 + $0xf8] sm:$0xff] %v276
        %s309 = sand.u32 %s75, 1
        %s310 = scalar_lea.sflag [#allocation4], %s309
        %s311 = sand.u32 %s75, 1
        %s312 = smul.addr %s311, 256
        %s313 = scalar_lea.vmem [#allocation7], %s312
        // Predicated region
        $region37: #{tpu_custom_call.1} parent=27 // pred_check
          %p314 = pneg %p85
        $region38: #{tpu_custom_call.1} parent=27 // pred_check_branch
          %316 = sbr.rel (%p314) target = $region40
        $region39: #{tpu_custom_call.1} parent=27 // pred_region
          %s317 = smul.u32 4, %s20
          %s319 = ssub.s32 4096, 4096
          %320 = vsyncadd %s310, %s319
          %s321 = smul.addr %s317, 8
          %s322 = smul.addr %s321, 128
          %s323 = scalar_lea.hbm %s2, %s322
          %s324 = sshll.u32 %s313, 4
          %s325 = int_to_ptr.vmem [resolvable:$true] %s324
          %330 = dma.vmem_to_hbm [thread:$0]  %s325, 4096, %s323, %s310, 1024, 1024, 64
        $region40: #{tpu_custom_call.1} parent=27 // pred_fallthru
          _
      $region28: #{tpu_custom_call.1} parent=5 // pred_fallthru
        _
      %p331 = scmp.le.s32.totalorder 2, %s15
      // Predicated region
      $region41: #{tpu_custom_call.1} parent=5 // pred_check
        %p332 = pneg %p331
      $region42: #{tpu_custom_call.1} parent=5 // pred_check_branch
        %334 = sbr.rel (%p332) target = $region44
      $region43: #{tpu_custom_call.1} parent=5 // pred_region
        %s335 = ssub.s32 %s15, 2
        // Predicated region
        $region45: #{tpu_custom_call.1} parent=43 // pred_check
          %p336 = pneg %p91
        $region46: #{tpu_custom_call.1} parent=43 // pred_check_branch
          %338 = sbr.rel (%p336) target = $region48
        $region47: #{tpu_custom_call.1} parent=43 // pred_region
          %s339 = sand.u32 %s76, 1
          %s340 = scalar_lea.sflag [#allocation4], %s339
          %s341 = sand.u32 %s76, 1
          %s342 = smul.addr %s341, 256
          %s343 = scalar_lea.vmem [#allocation7], %s342
          %344 = dma.done %s340, 4096
        $region48: #{tpu_custom_call.1} parent=43 // pred_fallthru
          _
      $region44: #{tpu_custom_call.1} parent=5 // pred_fallthru
        _
    $region6: #{tpu_custom_call.1} parent=1 // loop_footer
      %s19 = sadd.s32 1, %s15
    $region7: #{tpu_custom_call.1} parent=1 // loop_footer_branch
      %14 = sbr.rel target = $region3
    $region8: #{tpu_custom_call.1} parent=1 // loop_exit
      _
    %345 = vsyncpa [#allocation3], 1
    %s346 = scalar_lea.sflag [#allocation3], 1
    %347 = vsyncpa %s346, 1
    %348 = vsyncpa [#allocation4], 1
    %s349 = scalar_lea.sflag [#allocation4], 1
    %350 = vsyncpa %s349, 1
    %351 = vsyncpa [#allocation5], 1
    %s352 = scalar_lea.sflag [#allocation5], 1
    %353 = vsyncpa %s352, 1

</llo_original>
